<compile_context>
chip_gen: v7x
topology: tpu7x:2x2x1
jax: 0.10.0
libtpu: 0.0.40
codegen_flags: <defaults>
</compile_context>

<pallas_src>
import jax
import jax.numpy as jnp
from jax.experimental import pallas as pl
from jax.experimental.pallas import tpu as pltpu


# ----------------------------------------------------------------------------
# Fused kernel: 'Ori' backbone concat + Invar_Encoder, one program, no grid.
#   z0[:,  0: K] = ts_data ; z0[:, K:2K] = ts_tau ; z0[:, 2K:3K] = ts_mask
#   emb_mask[:, jK:(j+1)K] = ts_mask  for j in {0,1,2}
#   invar_emb = relu(demogra @ W + b)
# ----------------------------------------------------------------------------
def _ts_ori_fused_kernel(data_ref, tau_ref, mask_ref, demo_ref, w_ref, b_ref,
                         z0_ref, emb_mask_ref, invar_ref):
    K = data_ref.shape[-1]

    d = data_ref[...]                                   # [B*L, K]
    t = tau_ref[...]                                    # [B*L, K]
    m = mask_ref[...]                                   # [B*L, K]

    # Direct slice stores (no lane-axis concatenate, no intermediate array).
    z0_ref[:, 0:K]         = d.astype(z0_ref.dtype)
    z0_ref[:, K:2 * K]     = t.astype(z0_ref.dtype)
    z0_ref[:, 2 * K:3 * K] = m.astype(z0_ref.dtype)

    mm = m.astype(emb_mask_ref.dtype)
    emb_mask_ref[:, 0:K]         = mm
    emb_mask_ref[:, K:2 * K]     = mm
    emb_mask_ref[:, 2 * K:3 * K] = mm

    # Invar_Encoder: Linear + ReLU (tiny; fused here to avoid a second launch).
    x = demo_ref[...]                                   # [B, invar_dim]
    w = w_ref[...]                                      # [invar_dim, embed_dim]
    b = b_ref[...]                                      # [1, embed_dim]
    y = jnp.dot(x, w, preferred_element_type=jnp.float32) + b
    invar_ref[...] = jnp.maximum(y, 0.0).astype(invar_ref.dtype)


def ts_model_ori_fused(demogra, ts_data, ts_tau, ts_mask, invar_w, invar_b):
    B, L, K = ts_data.shape
    BL = B * L
    embed_dim = invar_w.shape[1]
    z0_dtype = jnp.promote_types(
        ts_data.dtype, jnp.promote_types(ts_tau.dtype, ts_mask.dtype))

    # Fold B and L into the sublane axis (free contiguous reshapes).
    data2 = ts_data.reshape(BL, K)
    tau2 = ts_tau.reshape(BL, K)
    mask2 = ts_mask.reshape(BL, K)

    z0_2d, emb_mask_2d, invar_emb = pl.pallas_call(
        _ts_ori_fused_kernel,
        out_shape=(
            jax.ShapeDtypeStruct((BL, 3 * K), z0_dtype),
            jax.ShapeDtypeStruct((BL, 3 * K), ts_mask.dtype),
            jax.ShapeDtypeStruct((B, embed_dim), demogra.dtype),
        ),
    )(data2, tau2, mask2, demogra, invar_w, invar_b)

    # [B*L, 3K] row-major is exactly the torch.cat(dim=2) layout of [B, L, 3K].
    return (z0_2d.reshape(B, L, 3 * K),
            emb_mask_2d.reshape(B, L, 3 * K),
            invar_emb)


_ts_model_ori_fused_jit = jax.jit(ts_model_ori_fused)


# ----------------------------------------------------------------------------
# TSModel wrapper ('Ori' backbone)
# ----------------------------------------------------------------------------
class TSModelPallas:
    def __init__(self, ts_dim, ts_embed_dim, var_dim, invar_dim, cate_dim,
                 ts_model_backbone="Ori"):
        assert ts_model_backbone == "Ori"
        self.embed_dim = ts_dim
        self.ts_embed_dim = ts_embed_dim
        self.var_dim = var_dim
        self.invar_dim = invar_dim
        self.cate_dim = cate_dim
        self.ts_model_backbone = ts_model_backbone
        # Deterministic synthetic Invar_Encoder parameters.
        self.invar_w = (
            jnp.arange(invar_dim * self.embed_dim, dtype=jnp.float32)
            .reshape(invar_dim, self.embed_dim) * 0.01
        )
        self.invar_b = (
            jnp.arange(self.embed_dim, dtype=jnp.float32).reshape(1, self.embed_dim)
            * 0.001
        )

    def forward(self, demogra, ts_data, ts_tt, ts_mask, ts_tau,
                restore_index=None):
        z0, ts_emb_mask, invar_emb = _ts_model_ori_fused_jit(
            demogra, ts_data, ts_tau, ts_mask, self.invar_w, self.invar_b)
        return z0, ts_emb_mask, ts_tt, invar_emb


if __name__ == "__main__":
    # Small shapes consistent with the module: B=2, L=8 (seq), K=var_dim=4,
    # invar_dim=6, embed_dim(ts_dim)=32.
    B, L, K = 2, 8, 4
    invar_dim, embed_dim, ts_embed_dim = 6, 32, 32

    key = jax.random.PRNGKey(0)
    k1, k2, k3, k4, k5 = jax.random.split(key, 5)
    demogra = jax.random.normal(k1, (B, invar_dim), dtype=jnp.float32)
    ts_data = jax.random.normal(k2, (B, L, K), dtype=jnp.float32)
    ts_tt   = jax.random.uniform(k3, (B, L), dtype=jnp.float32)
    ts_mask = (jax.random.uniform(k4, (B, L, K)) > 0.5).astype(jnp.float32)
    ts_tau  = jax.random.uniform(k5, (B, L, K), dtype=jnp.float32)

    model = TSModelPallas(ts_dim=embed_dim, ts_embed_dim=ts_embed_dim,
                          var_dim=K, invar_dim=invar_dim, cate_dim=0,
                          ts_model_backbone="Ori")

    z0, ts_emb_mask, tt_out, invar_emb = model.forward(
        demogra, ts_data, ts_tt, ts_mask, ts_tau)
    jax.block_until_ready((z0, ts_emb_mask, tt_out, invar_emb))

    # Reference check against plain-JAX semantics of the 'Ori' branch.
    z0_ref = jnp.concatenate([ts_data, ts_tau, ts_mask], axis=2)
    mask_ref = jnp.concatenate([ts_mask, ts_mask, ts_mask], axis=2)
    inv_ref = jnp.maximum(demogra @ model.invar_w + model.invar_b, 0.0)
    assert z0.shape == (B, L, 3 * K) and ts_emb_mask.shape == (B, L, 3 * K)
    assert invar_emb.shape == (B, embed_dim)
    assert jnp.allclose(z0, z0_ref), "z0 mismatch"
    assert jnp.allclose(ts_emb_mask, mask_ref), "mask mismatch"
    assert jnp.allclose(invar_emb, inv_ref, atol=1e-5), "invar_emb mismatch"
    assert jnp.array_equal(tt_out, ts_tt), "ts_tt pass-through mismatch"

    print("KERNEL_OK")
</pallas_src>

<mosaic_0001>
module attributes {stable_mosaic.version = 11 : i64} {
  func.func @_ts_ori_fused_kernel(%arg0: memref<16x4xf32, #tpu.memory_space<vmem>>, %arg1: memref<16x4xf32, #tpu.memory_space<vmem>>, %arg2: memref<16x4xf32, #tpu.memory_space<vmem>>, %arg3: memref<2x6xf32, #tpu.memory_space<vmem>>, %arg4: memref<6x32xf32, #tpu.memory_space<vmem>>, %arg5: memref<1x32xf32, #tpu.memory_space<vmem>>, %arg6: memref<16x12xf32, #tpu.memory_space<vmem>>, %arg7: memref<16x12xf32, #tpu.memory_space<vmem>>, %arg8: memref<2x32xf32, #tpu.memory_space<vmem>>) attributes {dimension_semantics = [], scalar_prefetch = 0 : i64, scratch_operands = 0 : i64, tpu.core_type = #tpu.core_type<tc>} {
    %c0 = arith.constant 0 : index
    %c0_0 = arith.constant 0 : index
    %0 = vector.load %arg0[%c0, %c0_0] : memref<16x4xf32, #tpu.memory_space<vmem>>, vector<16x4xf32>
    %c0_1 = arith.constant 0 : index
    %c0_2 = arith.constant 0 : index
    %1 = vector.load %arg1[%c0_1, %c0_2] : memref<16x4xf32, #tpu.memory_space<vmem>>, vector<16x4xf32>
    %c0_3 = arith.constant 0 : index
    %c0_4 = arith.constant 0 : index
    %2 = vector.load %arg2[%c0_3, %c0_4] : memref<16x4xf32, #tpu.memory_space<vmem>>, vector<16x4xf32>
    %c0_5 = arith.constant 0 : index
    %c0_6 = arith.constant 0 : index
    %3 = vector.load %arg6[%c0_5, %c0_6] : memref<16x12xf32, #tpu.memory_space<vmem>>, vector<16x4xf32>
    tpu.vector_store %arg6[%c0_5, %c0_6], %0 {strides = array<i32>} : memref<16x12xf32, #tpu.memory_space<vmem>>, vector<16x4xf32>,
    %c0_7 = arith.constant 0 : index
    %c4 = arith.constant 4 : index
    %4 = vector.load %arg6[%c0_7, %c4] : memref<16x12xf32, #tpu.memory_space<vmem>>, vector<16x4xf32>
    tpu.vector_store %arg6[%c0_7, %c4], %1 {strides = array<i32>} : memref<16x12xf32, #tpu.memory_space<vmem>>, vector<16x4xf32>,
    %c0_8 = arith.constant 0 : index
    %c8 = arith.constant 8 : index
    %5 = vector.load %arg6[%c0_8, %c8] : memref<16x12xf32, #tpu.memory_space<vmem>>, vector<16x4xf32>
    tpu.vector_store %arg6[%c0_8, %c8], %2 {strides = array<i32>} : memref<16x12xf32, #tpu.memory_space<vmem>>, vector<16x4xf32>,
    %c0_9 = arith.constant 0 : index
    %c0_10 = arith.constant 0 : index
    %6 = vector.load %arg7[%c0_9, %c0_10] : memref<16x12xf32, #tpu.memory_space<vmem>>, vector<16x4xf32>
    tpu.vector_store %arg7[%c0_9, %c0_10], %2 {strides = array<i32>} : memref<16x12xf32, #tpu.memory_space<vmem>>, vector<16x4xf32>,
    %c0_11 = arith.constant 0 : index
    %c4_12 = arith.constant 4 : index
    %7 = vector.load %arg7[%c0_11, %c4_12] : memref<16x12xf32, #tpu.memory_space<vmem>>, vector<16x4xf32>
    tpu.vector_store %arg7[%c0_11, %c4_12], %2 {strides = array<i32>} : memref<16x12xf32, #tpu.memory_space<vmem>>, vector<16x4xf32>,
    %c0_13 = arith.constant 0 : index
    %c8_14 = arith.constant 8 : index
    %8 = vector.load %arg7[%c0_13, %c8_14] : memref<16x12xf32, #tpu.memory_space<vmem>>, vector<16x4xf32>
    tpu.vector_store %arg7[%c0_13, %c8_14], %2 {strides = array<i32>} : memref<16x12xf32, #tpu.memory_space<vmem>>, vector<16x4xf32>,
    %c0_15 = arith.constant 0 : index
    %c0_16 = arith.constant 0 : index
    %9 = vector.load %arg3[%c0_15, %c0_16] : memref<2x6xf32, #tpu.memory_space<vmem>>, vector<2x6xf32>
    %c0_17 = arith.constant 0 : index
    %c0_18 = arith.constant 0 : index
    %10 = vector.load %arg4[%c0_17, %c0_18] : memref<6x32xf32, #tpu.memory_space<vmem>>, vector<6x32xf32>
    %c0_19 = arith.constant 0 : index
    %c0_20 = arith.constant 0 : index
    %11 = vector.load %arg5[%c0_19, %c0_20] : memref<1x32xf32, #tpu.memory_space<vmem>>, vector<1x32xf32>
    %cst = arith.constant dense<0.000000e+00> : vector<2x32xf32>
    %12 = tpu.matmul %9, %10, %cst {dimension_numbers = #tpu.dot_dimension_numbers<[1], [0], [0], [1], [0, 0, 1, 1], [], []>} : vector<2x6xf32>, vector<6x32xf32>, vector<2x32xf32> -> vector<2x32xf32>
    %13 = vector.broadcast %11 : vector<1x32xf32> to vector<2x32xf32>
    %14 = arith.addf %12, %13 : vector<2x32xf32>
    %cst_21 = arith.constant 0.000000e+00 : f32
    %15 = vector.broadcast %cst_21 : f32 to vector<2x32xf32>
    %16 = arith.maximumf %14, %15 : vector<2x32xf32>
    %c0_22 = arith.constant 0 : index
    %c0_23 = arith.constant 0 : index
    %17 = vector.load %arg8[%c0_22, %c0_23] : memref<2x32xf32, #tpu.memory_space<vmem>>, vector<2x32xf32>
    tpu.vector_store %arg8[%c0_22, %c0_23], %16 {strides = array<i32>} : memref<2x32xf32, #tpu.memory_space<vmem>>, vector<2x32xf32>,
    return
  }
}

</mosaic_0001>

<llo_original>
// kernel: ts_model_ori_fused.1
$region0: #{ts_model_ori_fused.1}
  #allocation0 [shape = 'u32[]', space=smem, size = 0x4, offset = 0x4, fixed_abs, tag = 'smem constant byte address 0x4 - core index']
  #allocation1 [shape = 'u32[144,128]{1,0:T(1,128)}', space=vmem, size = 0x12000, scoped, tag = 'internal scratch']
  %s0 = inlined_call_operand.vmem [shape: f32[16,4], index: 0, kind: input, shape index: {}]
  %s1 = inlined_call_operand.vmem [shape: f32[16,4], index: 1, kind: input, shape index: {}]
  %s2 = inlined_call_operand.vmem [shape: f32[16,4], index: 2, kind: input, shape index: {}]
  %s3 = inlined_call_operand.vmem [shape: f32[2,6], index: 3, kind: input, shape index: {}]
  %s4 = inlined_call_operand.vmem [shape: f32[6,32], index: 4, kind: input, shape index: {}]
  %s5 = inlined_call_operand.vmem [shape: f32[1,32], index: 5, kind: input, shape index: {}]
  %s6 = inlined_call_operand.hbm [shape: f32[16,12], index: 6, kind: output, shape index: {0}]
  %s7 = inlined_call_operand.hbm [shape: f32[16,12], index: 7, kind: output, shape index: {1}]
  %s8 = inlined_call_operand.hbm [shape: f32[2,32], index: 8, kind: output, shape index: {2}]
  %9 = xla_tuple %s6, %s7, %s8
  %s10 = sld [smem:[#allocation0]]
  $region50: #{ts_model_ori_fused.1} parent=0
    _
  %s12 = ssub.s32 1, %s10
  %s13 = scalar_select 0, %s12, %s10
  $region1: #{ts_model_ori_fused.1} parent=0
    #allocation2 [shape = 'u8[8192]{0}', space=vmem, size = 0x2000, scoped, tag = 'output window, operand 0, single buffered']
    #allocation3 [shape = 's32[1]{0}', space=sflag, size = 0x4, scoped, tag = 'scoped memory for ts_model_ori_fused.1']
    #allocation4 [shape = 'u8[8192]{0}', space=vmem, size = 0x2000, scoped, tag = 'output window, operand 1, single buffered']
    #allocation5 [shape = 's32[1]{0}', space=sflag, size = 0x4, scoped, tag = 'scoped memory for ts_model_ori_fused.1']
    #allocation6 [shape = 'u8[1024]{0}', space=vmem, size = 0x400, scoped, tag = 'output window, operand 2, single buffered']
    %14 = vsyncpa [#allocation3], 0
    %15 = vsyncpa [#allocation5], 0
    // Predicated region
    $region2: #{ts_model_ori_fused.1} parent=1 // pred_check
      _
    $region3: #{ts_model_ori_fused.1} parent=1 // pred_check_branch
      %17 = sbr.rel (0) target = $region5
    $region4: #{ts_model_ori_fused.1} parent=1 // pred_region
      _
    $region5: #{ts_model_ori_fused.1} parent=1 // pred_fallthru
      _
    // Predicated region
    $region6: #{ts_model_ori_fused.1} parent=1 // pred_check
      _
    $region7: #{ts_model_ori_fused.1} parent=1 // pred_check_branch
      %19 = sbr.rel (0) target = $region9
    $region8: #{ts_model_ori_fused.1} parent=1 // pred_region
      _
    $region9: #{ts_model_ori_fused.1} parent=1 // pred_fallthru
      _
    // Predicated region
    $region10: #{ts_model_ori_fused.1} parent=1 // pred_check
      _
    $region11: #{ts_model_ori_fused.1} parent=1 // pred_check_branch
      %21 = sbr.rel (0) target = $region13
    $region12: #{ts_model_ori_fused.1} parent=1 // pred_region
      _
    $region13: #{ts_model_ori_fused.1} parent=1 // pred_fallthru
      _
    // Predicated region
    $region14: #{ts_model_ori_fused.1} parent=1 // pred_check
      _
    $region15: #{ts_model_ori_fused.1} parent=1 // pred_check_branch
      %23 = sbr.rel (0) target = $region17
    $region16: #{ts_model_ori_fused.1} parent=1 // pred_region
      _
    $region17: #{ts_model_ori_fused.1} parent=1 // pred_fallthru
      _
    // Predicated region
    $region18: #{ts_model_ori_fused.1} parent=1 // pred_check
      _
    $region19: #{ts_model_ori_fused.1} parent=1 // pred_check_branch
      %25 = sbr.rel (0) target = $region21
    $region20: #{ts_model_ori_fused.1} parent=1 // pred_region
      _
    $region21: #{ts_model_ori_fused.1} parent=1 // pred_fallthru
      _
    // Predicated region
    $region22: #{ts_model_ori_fused.1} parent=1 // pred_check
      _
    $region23: #{ts_model_ori_fused.1} parent=1 // pred_check_branch
      %27 = sbr.rel (0) target = $region25
    $region24: #{ts_model_ori_fused.1} parent=1 // pred_region
      _
    $region25: #{ts_model_ori_fused.1} parent=1 // pred_fallthru
      _
    %v28 = vld [vmem:[%s0] sm:$0xff]
    %v29 = vld [vmem:[%s0 + $0x8] sm:$0xff]
    %v30 = vld [vmem:[%s1] sm:$0xff]
    %v31 = vld [vmem:[%s1 + $0x8] sm:$0xff]
    %v32 = vld [vmem:[%s2] sm:$0xff]
    %v33 = vld [vmem:[%s2 + $0x8] sm:$0xff]
    %vm34 = vcmask 31744
    %35 = vst.msk [vmem:[#allocation2] sm:$0xff] %vm34, %v28
    %36 = vst.msk [vmem:[#allocation2 + $0x8] sm:$0xff] %vm34, %v29
    %39 = vrot.lane.b32.xlu0 %v30, 4
    %v40 = vpop.permute.xlu0 %39
    %41 = vrot.lane.b32.xlu0 %v31, 4
    %v42 = vpop.permute.xlu0 %41
    %vm45 = vcmask 64544
    %46 = vst.msk [vmem:[#allocation2] sm:$0xff] %vm45, %v40
    %47 = vst.msk [vmem:[#allocation2 + $0x8] sm:$0xff] %vm45, %v42
    %50 = vrot.lane.b32.xlu0 %v32, 8
    %v51 = vpop.permute.xlu0 %50
    %52 = vrot.lane.b32.xlu0 %v33, 8
    %v53 = vpop.permute.xlu0 %52
    %vm56 = vcmask 97344
    %57 = vst.msk [vmem:[#allocation2] sm:$0xff] %vm56, %v51
    %58 = vst.msk [vmem:[#allocation2 + $0x8] sm:$0xff] %vm56, %v53
    %59 = vst.msk [vmem:[#allocation4] sm:$0xff] %vm34, %v32
    %60 = vst.msk [vmem:[#allocation4 + $0x8] sm:$0xff] %vm34, %v33
    %61 = vrot.lane.b32.xlu0 %v32, 4
    %v62 = vpop.permute.xlu0 %61
    %63 = vrot.lane.b32.xlu0 %v33, 4
    %v64 = vpop.permute.xlu0 %63
    %67 = vst.msk [vmem:[#allocation4] sm:$0xff] %vm45, %v62
    %68 = vst.msk [vmem:[#allocation4 + $0x8] sm:$0xff] %vm45, %v64
    %69 = vst.msk [vmem:[#allocation4] sm:$0xff] %vm56, %v51
    %70 = vst.msk [vmem:[#allocation4 + $0x8] sm:$0xff] %vm56, %v53
    %v71 = vld [vmem:[%s3] sm:$0x3]
    %v72 = vld [vmem:[%s4] sm:$0x3f]
    %v73 = vld [vmem:[%s5] sm:$0x1]
    %v75 = vlaneseq
    %v76 = vshrl.u32 %v75, 7
    %v77 = vsub.s32 0, %v76
    %v78 = vrot.slane %v73, %v77
    %vm80 = vcmask 48128
    %v82 = vsel %vm80, %v71, 0
    %vm84 = vcmask 1045504
    %v86 = vsel %vm84, %v72, 0
    %88 = vmatprep.subr.mxu0 0.0
    %89 = vmatpush1.msra.mxu0 %v86
    %90 = vmatprep.subr.mxu0 0.0
    %91 = vmatpush1.msra.mxu0 0.0
    %92 = vmatprep.subr.mxu0 0.0
    %93 = vmatpush1.msra.mxu0 0.0
    %94 = vmatprep.subr.mxu0 0.0
    %95 = vmatpush1.msra.mxu0 0.0
    %96 = vmatprep.subr.mxu0 0.0
    %97 = vmatpush1.msra.mxu0 0.0
    %98 = vmatprep.subr.mxu0 0.0
    %99 = vmatpush1.msra.mxu0 0.0
    %100 = vmatprep.subr.mxu0 0.0
    %101 = vmatpush1.msra.mxu0 0.0
    %102 = vmatprep.subr.mxu0 0.0
    %103 = vmatpush1.msra.mxu0 0.0
    %104 = vmatprep.subr.mxu0 0.0
    %105 = vmatpush1.msra.mxu0 0.0
    %106 = vmatprep.subr.mxu0 0.0
    %107 = vmatpush1.msra.mxu0 0.0
    %108 = vmatprep.subr.mxu0 0.0
    %109 = vmatpush1.msra.mxu0 0.0
    %110 = vmatprep.subr.mxu0 0.0
    %111 = vmatpush1.msra.mxu0 0.0
    %112 = vmatprep.subr.mxu0 0.0
    %113 = vmatpush1.msra.mxu0 0.0
    %114 = vmatprep.subr.mxu0 0.0
    %115 = vmatpush1.msra.mxu0 0.0
    %116 = vmatprep.subr.mxu0 0.0
    %117 = vmatpush1.msra.mxu0 0.0
    %118 = vmatprep.subr.mxu0 0.0
    %119 = vmatpush1.msra.mxu0 0.0
    %120 = vmatprep.subr.mxu0 0.0
    %121 = vmatpush1.msra.mxu0 0.0
    %122 = vmatprep.subr.mxu0 0.0
    %123 = vmatpush1.msra.mxu0 0.0
    %124 = vmatprep.subr.mxu0 0.0
    %125 = vmatpush1.msra.mxu0 0.0
    %126 = vmatprep.subr.mxu0 0.0
    %127 = vmatpush1.msra.mxu0 0.0
    %128 = vmatprep.subr.mxu0 0.0
    %129 = vmatpush1.msra.mxu0 0.0
    %130 = vmatprep.subr.mxu0 0.0
    %131 = vmatpush1.msra.mxu0 0.0
    %132 = vmatprep.subr.mxu0 0.0
    %133 = vmatpush1.msra.mxu0 0.0
    %134 = vmatprep.subr.mxu0 0.0
    %135 = vmatpush1.msra.mxu0 0.0
    %136 = vmatprep.subr.mxu0 0.0
    %137 = vmatpush1.msra.mxu0 0.0
    %138 = vmatprep.subr.mxu0 0.0
    %139 = vmatpush1.msra.mxu0 0.0
    %140 = vmatprep.subr.mxu0 0.0
    %141 = vmatpush1.msra.mxu0 0.0
    %142 = vmatprep.subr.mxu0 0.0
    %143 = vmatpush1.msra.mxu0 0.0
    %144 = vmatprep.subr.mxu0 0.0
    %145 = vmatpush1.msra.mxu0 0.0
    %146 = vmatprep.subr.mxu0 0.0
    %147 = vmatpush1.msra.mxu0 0.0
    %148 = vmatprep.subr.mxu0 0.0
    %149 = vmatpush1.msra.mxu0 0.0
    %150 = vmatprep.subr.mxu0 0.0
    %151 = vmatpush1.msra.mxu0 0.0
    %152 = vmatprep.mubr.f32.mxu0 0.0
    %153 = vmatmul.mubr.f32.gmra.mrb[0].mxu0 %v82
    %v154 = vpop.f32.mrb[0].mxu0
    %v155 = vadd.f32 %v78, %v154
    %v156 = vpop.f32.mrb[0].mxu0
    %157 = vdwg.mxu0
    %v158 = vmax.f32 %v155, 0.0
    %vm159 = vcmask 254976
    %160 = vst.msk [vmem:[#allocation6] sm:$0x3] %vm159, %v158
    // Predicated region
    $region26: #{ts_model_ori_fused.1} parent=1 // pred_check
      _
    $region27: #{ts_model_ori_fused.1} parent=1 // pred_check_branch
      %162 = sbr.rel (0) target = $region29
    $region28: #{ts_model_ori_fused.1} parent=1 // pred_region
      %s164 = ssub.s32 256, 256
      %165 = vsyncadd [#allocation3], %s164
      %s166 = sshll.u32 [#allocation2], 4
      %s167 = int_to_ptr.vmem [resolvable:$true] %s166
      %172 = dma.vmem_to_hbm [thread:$0]  %s167, 256, %s6, [#allocation3], 128, 128, 8
    $region29: #{ts_model_ori_fused.1} parent=1 // pred_fallthru
      _
    // Predicated region
    $region30: #{ts_model_ori_fused.1} parent=1 // pred_check
      _
    $region31: #{ts_model_ori_fused.1} parent=1 // pred_check_branch
      %174 = sbr.rel (0) target = $region33
    $region32: #{ts_model_ori_fused.1} parent=1 // pred_region
      %s176 = ssub.s32 256, 256
      %177 = vsyncadd [#allocation5], %s176
      %s178 = sshll.u32 [#allocation4], 4
      %s179 = int_to_ptr.vmem [resolvable:$true] %s178
      %184 = dma.vmem_to_hbm [thread:$0]  %s179, 256, %s7, [#allocation5], 128, 128, 8
    $region33: #{ts_model_ori_fused.1} parent=1 // pred_fallthru
      _
    // Predicated region
    $region34: #{ts_model_ori_fused.1} parent=1 // pred_check
      _
    $region35: #{ts_model_ori_fused.1} parent=1 // pred_check_branch
      %186 = sbr.rel (0) target = $region37
    $region36: #{ts_model_ori_fused.1} parent=1 // pred_region
      %s188 = ssub.s32 32, 32
      %189 = vsyncadd [#allocation5], %s188
      %s191 = sshll.u32 [#allocation6], 4
      %s192 = int_to_ptr.vmem [resolvable:$true] %s191
      %194 = dma.vmem_to_hbm [thread:$0]  %s192, 32, %s8, [#allocation5]
    $region37: #{ts_model_ori_fused.1} parent=1 // pred_fallthru
      _
    // Predicated region
    $region38: #{ts_model_ori_fused.1} parent=1 // pred_check
      _
    $region39: #{ts_model_ori_fused.1} parent=1 // pred_check_branch
      %196 = sbr.rel (0) target = $region41
    $region40: #{ts_model_ori_fused.1} parent=1 // pred_region
      %197 = dma.done [#allocation3], 256
    $region41: #{ts_model_ori_fused.1} parent=1 // pred_fallthru
      _
    // Predicated region
    $region42: #{ts_model_ori_fused.1} parent=1 // pred_check
      _
    $region43: #{ts_model_ori_fused.1} parent=1 // pred_check_branch
      %199 = sbr.rel (0) target = $region45
    $region44: #{ts_model_ori_fused.1} parent=1 // pred_region
      %200 = dma.done [#allocation5], 256
    $region45: #{ts_model_ori_fused.1} parent=1 // pred_fallthru
      _
    // Predicated region
    $region46: #{ts_model_ori_fused.1} parent=1 // pred_check
      _
    $region47: #{ts_model_ori_fused.1} parent=1 // pred_check_branch
      %202 = sbr.rel (0) target = $region49
    $region48: #{ts_model_ori_fused.1} parent=1 // pred_region
      %203 = dma.done [#allocation5], 32
    $region49: #{ts_model_ori_fused.1} parent=1 // pred_fallthru
      _
    %204 = vsyncpa [#allocation3], 1
    %205 = vsyncpa [#allocation5], 1

</llo_original>
